<compile_context>
chip_gen: v7x
topology: tpu7x:2x2x1
jax: 0.10.0
libtpu: 0.0.40
codegen_flags: <defaults>
</compile_context>

<pallas_src>
import jax
import jax.numpy as jnp
from jax.experimental import pallas as pl
from jax.experimental.pallas import tpu as pltpu

TILE_B = 128   # batch rows per grid step (fills MXU M-dim)
LANE = 128     # TPU lane width; final output padded to a multiple of this


def _mlp_kernel(x_ref,
                w1_ref, b1_ref,
                w2_ref, b2_ref,
                w3_ref, b3_ref,
                w4_ref, b4_ref,
                out_ref):
    # Whole MLP hot path (4 bf16 matmuls + 3 f32 ReLUs) runs VMEM-resident.
    x = x_ref[...].astype(jnp.bfloat16)

    h = jnp.dot(x, w1_ref[...], preferred_element_type=jnp.float32) + b1_ref[...]
    h = jnp.maximum(h, 0.0)                      # f32 elementwise (v5e-safe)

    h = jnp.dot(h.astype(jnp.bfloat16), w2_ref[...],
                preferred_element_type=jnp.float32) + b2_ref[...]
    h = jnp.maximum(h, 0.0)

    h = jnp.dot(h.astype(jnp.bfloat16), w3_ref[...],
                preferred_element_type=jnp.float32) + b3_ref[...]
    h = jnp.maximum(h, 0.0)

    y = jnp.dot(h.astype(jnp.bfloat16), w4_ref[...],
                preferred_element_type=jnp.float32) + b4_ref[...]
    out_ref[...] = y                             # lane-dense (padded) f32 store


def deep_q_net(x, params):
    """Forward pass of DeepQNet.

    x: (batch, state_dim) float32
    params: dict with w1..w4 of shape (in, out) and b1..b4 of shape (1, out),
            all float32. Returns (batch, action_dim) float32 Q-values.
    """
    batch, state_dim = x.shape
    action_dim = params["w4"].shape[1]

    # Pad batch up to a multiple of TILE_B and the final layer out to 128 lanes.
    b_pad = pl.cdiv(batch, TILE_B) * TILE_B
    out_pad = pl.cdiv(action_dim, LANE) * LANE

    x_p = x if b_pad == batch else jnp.pad(x, ((0, b_pad - batch), (0, 0)))

    # bf16 weights (halves HBM->VMEM bytes, bf16-native MXU); f32 biases.
    w1 = params["w1"].astype(jnp.bfloat16)
    w2 = params["w2"].astype(jnp.bfloat16)
    w3 = params["w3"].astype(jnp.bfloat16)
    w4 = jnp.pad(params["w4"],
                 ((0, 0), (0, out_pad - action_dim))).astype(jnp.bfloat16)
    b1, b2, b3 = params["b1"], params["b2"], params["b3"]
    b4 = jnp.pad(params["b4"], ((0, 0), (0, out_pad - action_dim)))

    # Weights/biases: full-array blocks, constant index_map -> VMEM-resident
    # across all grid steps; only x / out are streamed per batch tile.
    def resident(a):
        return pl.BlockSpec(a.shape, lambda i: (0, 0))

    grid = (b_pad // TILE_B,)

    out = pl.pallas_call(
        _mlp_kernel,
        out_shape=jax.ShapeDtypeStruct((b_pad, out_pad), jnp.float32),
        grid=grid,
        in_specs=[
            pl.BlockSpec((TILE_B, state_dim), lambda i: (i, 0)),
            resident(w1), resident(b1),
            resident(w2), resident(b2),
            resident(w3), resident(b3),
            resident(w4), resident(b4),
        ],
        out_specs=pl.BlockSpec((TILE_B, out_pad), lambda i: (i, 0)),
        compiler_params=pltpu.CompilerParams(
            dimension_semantics=("parallel",)),   # v7x: shard batch over 2 TCs
    )(x_p, w1, b1, w2, b2, w3, b3, w4, b4)

    return out[:batch, :action_dim]


def init_params(key, state_dim, action_dim, hidden_dim):
    """Deterministic synthetic init matching nn.Linear shapes (transposed)."""
    ks = jax.random.split(key, 8)
    dims = [(state_dim, hidden_dim), (hidden_dim, hidden_dim),
            (hidden_dim, hidden_dim), (hidden_dim, action_dim)]
    params = {}
    for i, (fan_in, fan_out) in enumerate(dims, start=1):
        bound = 1.0 / jnp.sqrt(fan_in)
        params[f"w{i}"] = jax.random.uniform(
            ks[2 * (i - 1)], (fan_in, fan_out), jnp.float32, -bound, bound)
        params[f"b{i}"] = jax.random.uniform(
            ks[2 * (i - 1) + 1], (1, fan_out), jnp.float32, -bound, bound)
    return params


def _reference(x, params):
    """Pure-JAX reference mirroring the kernel's bf16-matmul / f32-acc math."""
    bf16 = jnp.bfloat16
    h = jnp.dot(x.astype(bf16), params["w1"].astype(bf16),
                preferred_element_type=jnp.float32) + params["b1"]
    h = jnp.maximum(h, 0.0)
    h = jnp.dot(h.astype(bf16), params["w2"].astype(bf16),
                preferred_element_type=jnp.float32) + params["b2"]
    h = jnp.maximum(h, 0.0)
    h = jnp.dot(h.astype(bf16), params["w3"].astype(bf16),
                preferred_element_type=jnp.float32) + params["b3"]
    h = jnp.maximum(h, 0.0)
    return jnp.dot(h.astype(bf16), params["w4"].astype(bf16),
                   preferred_element_type=jnp.float32) + params["b4"]


if __name__ == "__main__":
    state_dim, action_dim, hidden_dim = 16, 8, 128
    batch = 8   # small demo batch; wrapper pads to a full 128-row MXU tile

    key = jax.random.PRNGKey(0)
    k_x, k_p = jax.random.split(key)
    x = jax.random.normal(k_x, (batch, state_dim), jnp.float32)
    params = init_params(k_p, state_dim, action_dim, hidden_dim)

    q = deep_q_net(x, params)
    q = jax.block_until_ready(q)

    ref = _reference(x, params)
    assert q.shape == (batch, action_dim)
    assert jnp.allclose(q, ref, atol=1e-3, rtol=1e-3), (
        float(jnp.max(jnp.abs(q - ref))))

    print("KERNEL_OK")
</pallas_src>

<mosaic_0001>
module attributes {stable_mosaic.version = 11 : i64} {
  func.func @_mlp_kernel(%arg0: i32, %arg1: memref<128x16xf32, #tpu.memory_space<vmem>>, %arg2: memref<16x128xbf16, #tpu.memory_space<vmem>>, %arg3: memref<1x128xf32, #tpu.memory_space<vmem>>, %arg4: memref<128x128xbf16, #tpu.memory_space<vmem>>, %arg5: memref<1x128xf32, #tpu.memory_space<vmem>>, %arg6: memref<128x128xbf16, #tpu.memory_space<vmem>>, %arg7: memref<1x128xf32, #tpu.memory_space<vmem>>, %arg8: memref<128x128xbf16, #tpu.memory_space<vmem>>, %arg9: memref<1x128xf32, #tpu.memory_space<vmem>>, %arg10: memref<128x128xf32, #tpu.memory_space<vmem>>) attributes {dimension_semantics = [#tpu.dimension_semantics<parallel>], iteration_bounds = array<i64: 1>, scalar_prefetch = 0 : i64, scratch_operands = 0 : i64, tpu.core_type = #tpu.core_type<tc>, window_params = [{transform_indices = @transform_0, window_bounds = array<i64: 128, 16>}, {pipeline_mode = #tpu.pipeline_mode<synchronous>, transform_indices = @transform_1, window_bounds = array<i64: 16, 128>}, {pipeline_mode = #tpu.pipeline_mode<synchronous>, transform_indices = @transform_2, window_bounds = array<i64: 1, 128>}, {pipeline_mode = #tpu.pipeline_mode<synchronous>, transform_indices = @transform_3, window_bounds = array<i64: 128, 128>}, {pipeline_mode = #tpu.pipeline_mode<synchronous>, transform_indices = @transform_4, window_bounds = array<i64: 1, 128>}, {pipeline_mode = #tpu.pipeline_mode<synchronous>, transform_indices = @transform_5, window_bounds = array<i64: 128, 128>}, {pipeline_mode = #tpu.pipeline_mode<synchronous>, transform_indices = @transform_6, window_bounds = array<i64: 1, 128>}, {pipeline_mode = #tpu.pipeline_mode<synchronous>, transform_indices = @transform_7, window_bounds = array<i64: 128, 128>}, {pipeline_mode = #tpu.pipeline_mode<synchronous>, transform_indices = @transform_8, window_bounds = array<i64: 1, 128>}, {transform_indices = @transform_9, window_bounds = array<i64: 128, 128>}]} {
    %c0 = arith.constant 0 : index
    %c0_0 = arith.constant 0 : index
    %0 = vector.load %arg1[%c0, %c0_0] : memref<128x16xf32, #tpu.memory_space<vmem>>, vector<128x16xf32>
    %1 = arith.truncf %0 : vector<128x16xf32> to vector<128x16xbf16>
    %c0_1 = arith.constant 0 : index
    %c0_2 = arith.constant 0 : index
    %2 = vector.load %arg2[%c0_1, %c0_2] : memref<16x128xbf16, #tpu.memory_space<vmem>>, vector<16x128xbf16>
    %cst = arith.constant dense<0.000000e+00> : vector<128x128xf32>
    %3 = tpu.matmul %1, %2, %cst {dimension_numbers = #tpu.dot_dimension_numbers<[1], [0], [0], [1], [0, 0, 1, 1], [], []>} : vector<128x16xbf16>, vector<16x128xbf16>, vector<128x128xf32> -> vector<128x128xf32>
    %c0_3 = arith.constant 0 : index
    %c0_4 = arith.constant 0 : index
    %4 = vector.load %arg3[%c0_3, %c0_4] : memref<1x128xf32, #tpu.memory_space<vmem>>, vector<1x128xf32>
    %5 = vector.broadcast %4 : vector<1x128xf32> to vector<128x128xf32>
    %6 = arith.addf %3, %5 : vector<128x128xf32>
    %cst_5 = arith.constant 0.000000e+00 : f32
    %7 = vector.broadcast %cst_5 : f32 to vector<128x128xf32>
    %8 = arith.maximumf %6, %7 : vector<128x128xf32>
    %9 = arith.truncf %8 : vector<128x128xf32> to vector<128x128xbf16>
    %c0_6 = arith.constant 0 : index
    %c0_7 = arith.constant 0 : index
    %10 = vector.load %arg4[%c0_6, %c0_7] : memref<128x128xbf16, #tpu.memory_space<vmem>>, vector<128x128xbf16>
    %cst_8 = arith.constant dense<0.000000e+00> : vector<128x128xf32>
    %11 = tpu.matmul %9, %10, %cst_8 {dimension_numbers = #tpu.dot_dimension_numbers<[1], [0], [0], [1], [0, 0, 1, 1], [], []>} : vector<128x128xbf16>, vector<128x128xbf16>, vector<128x128xf32> -> vector<128x128xf32>
    %c0_9 = arith.constant 0 : index
    %c0_10 = arith.constant 0 : index
    %12 = vector.load %arg5[%c0_9, %c0_10] : memref<1x128xf32, #tpu.memory_space<vmem>>, vector<1x128xf32>
    %13 = vector.broadcast %12 : vector<1x128xf32> to vector<128x128xf32>
    %14 = arith.addf %11, %13 : vector<128x128xf32>
    %cst_11 = arith.constant 0.000000e+00 : f32
    %15 = vector.broadcast %cst_11 : f32 to vector<128x128xf32>
    %16 = arith.maximumf %14, %15 : vector<128x128xf32>
    %17 = arith.truncf %16 : vector<128x128xf32> to vector<128x128xbf16>
    %c0_12 = arith.constant 0 : index
    %c0_13 = arith.constant 0 : index
    %18 = vector.load %arg6[%c0_12, %c0_13] : memref<128x128xbf16, #tpu.memory_space<vmem>>, vector<128x128xbf16>
    %cst_14 = arith.constant dense<0.000000e+00> : vector<128x128xf32>
    %19 = tpu.matmul %17, %18, %cst_14 {dimension_numbers = #tpu.dot_dimension_numbers<[1], [0], [0], [1], [0, 0, 1, 1], [], []>} : vector<128x128xbf16>, vector<128x128xbf16>, vector<128x128xf32> -> vector<128x128xf32>
    %c0_15 = arith.constant 0 : index
    %c0_16 = arith.constant 0 : index
    %20 = vector.load %arg7[%c0_15, %c0_16] : memref<1x128xf32, #tpu.memory_space<vmem>>, vector<1x128xf32>
    %21 = vector.broadcast %20 : vector<1x128xf32> to vector<128x128xf32>
    %22 = arith.addf %19, %21 : vector<128x128xf32>
    %cst_17 = arith.constant 0.000000e+00 : f32
    %23 = vector.broadcast %cst_17 : f32 to vector<128x128xf32>
    %24 = arith.maximumf %22, %23 : vector<128x128xf32>
    %25 = arith.truncf %24 : vector<128x128xf32> to vector<128x128xbf16>
    %c0_18 = arith.constant 0 : index
    %c0_19 = arith.constant 0 : index
    %26 = vector.load %arg8[%c0_18, %c0_19] : memref<128x128xbf16, #tpu.memory_space<vmem>>, vector<128x128xbf16>
    %cst_20 = arith.constant dense<0.000000e+00> : vector<128x128xf32>
    %27 = tpu.matmul %25, %26, %cst_20 {dimension_numbers = #tpu.dot_dimension_numbers<[1], [0], [0], [1], [0, 0, 1, 1], [], []>} : vector<128x128xbf16>, vector<128x128xbf16>, vector<128x128xf32> -> vector<128x128xf32>
    %c0_21 = arith.constant 0 : index
    %c0_22 = arith.constant 0 : index
    %28 = vector.load %arg9[%c0_21, %c0_22] : memref<1x128xf32, #tpu.memory_space<vmem>>, vector<1x128xf32>
    %29 = vector.broadcast %28 : vector<1x128xf32> to vector<128x128xf32>
    %30 = arith.addf %27, %29 : vector<128x128xf32>
    %c0_23 = arith.constant 0 : index
    %c0_24 = arith.constant 0 : index
    %31 = vector.load %arg10[%c0_23, %c0_24] : memref<128x128xf32, #tpu.memory_space<vmem>>, vector<128x128xf32>
    tpu.vector_store %arg10[%c0_23, %c0_24], %30 {strides = array<i32>} : memref<128x128xf32, #tpu.memory_space<vmem>>, vector<128x128xf32>,
    return
  }
  func.func @transform_0(%arg0: i32) -> (i32, i32) {
    %c0_i32 = arith.constant 0 : i32
    %c0_i32_0 = arith.constant 0 : i32
    return %arg0, %c0_i32 : i32, i32
  }
  func.func @transform_1(%arg0: i32) -> (i32, i32) {
    %c0_i32 = arith.constant 0 : i32
    %c0_i32_0 = arith.constant 0 : i32
    %c0_i32_1 = arith.constant 0 : i32
    return %c0_i32, %c0_i32_0 : i32, i32
  }
  func.func @transform_2(%arg0: i32) -> (i32, i32) {
    %c0_i32 = arith.constant 0 : i32
    %c0_i32_0 = arith.constant 0 : i32
    %c0_i32_1 = arith.constant 0 : i32
    return %c0_i32, %c0_i32_0 : i32, i32
  }
  func.func @transform_3(%arg0: i32) -> (i32, i32) {
    %c0_i32 = arith.constant 0 : i32
    %c0_i32_0 = arith.constant 0 : i32
    %c0_i32_1 = arith.constant 0 : i32
    return %c0_i32, %c0_i32_0 : i32, i32
  }
  func.func @transform_4(%arg0: i32) -> (i32, i32) {
    %c0_i32 = arith.constant 0 : i32
    %c0_i32_0 = arith.constant 0 : i32
    %c0_i32_1 = arith.constant 0 : i32
    return %c0_i32, %c0_i32_0 : i32, i32
  }
  func.func @transform_5(%arg0: i32) -> (i32, i32) {
    %c0_i32 = arith.constant 0 : i32
    %c0_i32_0 = arith.constant 0 : i32
    %c0_i32_1 = arith.constant 0 : i32
    return %c0_i32, %c0_i32_0 : i32, i32
  }
  func.func @transform_6(%arg0: i32) -> (i32, i32) {
    %c0_i32 = arith.constant 0 : i32
    %c0_i32_0 = arith.constant 0 : i32
    %c0_i32_1 = arith.constant 0 : i32
    return %c0_i32, %c0_i32_0 : i32, i32
  }
  func.func @transform_7(%arg0: i32) -> (i32, i32) {
    %c0_i32 = arith.constant 0 : i32
    %c0_i32_0 = arith.constant 0 : i32
    %c0_i32_1 = arith.constant 0 : i32
    return %c0_i32, %c0_i32_0 : i32, i32
  }
  func.func @transform_8(%arg0: i32) -> (i32, i32) {
    %c0_i32 = arith.constant 0 : i32
    %c0_i32_0 = arith.constant 0 : i32
    %c0_i32_1 = arith.constant 0 : i32
    return %c0_i32, %c0_i32_0 : i32, i32
  }
  func.func @transform_9(%arg0: i32) -> (i32, i32) {
    %c0_i32 = arith.constant 0 : i32
    %c0_i32_0 = arith.constant 0 : i32
    return %arg0, %c0_i32 : i32, i32
  }
}

</mosaic_0001>

<llo_original>
// kernel: tpu_custom_call.1
$region0: #{tpu_custom_call.1}
  #allocation0 [shape = 'u32[]', space=smem, size = 0x4, offset = 0x4, fixed_abs, tag = 'smem constant byte address 0x4 - core index']
  #allocation1 [shape = 'u32[144,128]{1,0:T(1,128)}', space=vmem, size = 0x12000, scoped, tag = 'internal scratch']
  %s0 = inlined_call_operand.vmem [shape: f32[128,16], index: 0, kind: input, shape index: {}]
  %s1 = inlined_call_operand.vmem [shape: bf16[16,128], index: 1, kind: input, shape index: {}]
  %s2 = inlined_call_operand.vmem [shape: f32[1,128], index: 2, kind: input, shape index: {}]
  %s3 = inlined_call_operand.vmem [shape: bf16[128,128], index: 3, kind: input, shape index: {}]
  %s4 = inlined_call_operand.vmem [shape: f32[1,128], index: 4, kind: input, shape index: {}]
  %s5 = inlined_call_operand.vmem [shape: bf16[128,128], index: 5, kind: input, shape index: {}]
  %s6 = inlined_call_operand.vmem [shape: f32[1,128], index: 6, kind: input, shape index: {}]
  %s7 = inlined_call_operand.hbm [shape: bf16[128,128], index: 7, kind: input, shape index: {}]
  %s8 = inlined_call_operand.vmem [shape: f32[1,128], index: 8, kind: input, shape index: {}]
  %s9 = inlined_call_operand.hbm [shape: f32[128,128], index: 9, kind: output, shape index: {}]
  %s10 = sld [smem:[#allocation0]]
  $region50: #{tpu_custom_call.1} parent=0
    _
  %s12 = ssub.s32 1, %s10
  %s13 = scalar_select 0, %s12, %s10
  $region1: #{tpu_custom_call.1} parent=0
    #allocation2 [shape = 'u8[32768]{0}', space=vmem, size = 0x8000, scoped, tag = 'input window, operand 7, single buffered']
    #allocation3 [shape = 's32[1]{0}', space=sflag, size = 0x4, scoped, tag = 'scoped memory for tpu_custom_call.1']
    #allocation4 [shape = 's32[1]{0}', space=sflag, size = 0x4, scoped, tag = 'scoped memory for tpu_custom_call.1']
    #allocation5 [shape = 'u8[65536]{0}', space=vmem, size = 0x10000, scoped, tag = 'output window, operand 0, single buffered']
    %14 = vsyncpa [#allocation3], 0
    %15 = vsyncpa [#allocation4], 0
    // Predicated region
    $region2: #{tpu_custom_call.1} parent=1 // pred_check
      _
    $region3: #{tpu_custom_call.1} parent=1 // pred_check_branch
      %17 = sbr.rel (0) target = $region5
    $region4: #{tpu_custom_call.1} parent=1 // pred_region
      _
    $region5: #{tpu_custom_call.1} parent=1 // pred_fallthru
      _
    // Predicated region
    $region6: #{tpu_custom_call.1} parent=1 // pred_check
      _
    $region7: #{tpu_custom_call.1} parent=1 // pred_check_branch
      %19 = sbr.rel (0) target = $region9
    $region8: #{tpu_custom_call.1} parent=1 // pred_region
      _
    $region9: #{tpu_custom_call.1} parent=1 // pred_fallthru
      _
    // Predicated region
    $region10: #{tpu_custom_call.1} parent=1 // pred_check
      _
    $region11: #{tpu_custom_call.1} parent=1 // pred_check_branch
      %21 = sbr.rel (0) target = $region13
    $region12: #{tpu_custom_call.1} parent=1 // pred_region
      _
    $region13: #{tpu_custom_call.1} parent=1 // pred_fallthru
      _
    // Predicated region
    $region14: #{tpu_custom_call.1} parent=1 // pred_check
      _
    $region15: #{tpu_custom_call.1} parent=1 // pred_check_branch
      %23 = sbr.rel (0) target = $region17
    $region16: #{tpu_custom_call.1} parent=1 // pred_region
      _
    $region17: #{tpu_custom_call.1} parent=1 // pred_fallthru
      _
    // Predicated region
    $region18: #{tpu_custom_call.1} parent=1 // pred_check
      _
    $region19: #{tpu_custom_call.1} parent=1 // pred_check_branch
      %25 = sbr.rel (0) target = $region21
    $region20: #{tpu_custom_call.1} parent=1 // pred_region
      _
    $region21: #{tpu_custom_call.1} parent=1 // pred_fallthru
      _
    // Predicated region
    $region22: #{tpu_custom_call.1} parent=1 // pred_check
      _
    $region23: #{tpu_custom_call.1} parent=1 // pred_check_branch
      %27 = sbr.rel (0) target = $region25
    $region24: #{tpu_custom_call.1} parent=1 // pred_region
      _
    $region25: #{tpu_custom_call.1} parent=1 // pred_fallthru
      _
    // Predicated region
    $region26: #{tpu_custom_call.1} parent=1 // pred_check
      _
    $region27: #{tpu_custom_call.1} parent=1 // pred_check_branch
      %29 = sbr.rel (0) target = $region29
    $region28: #{tpu_custom_call.1} parent=1 // pred_region
      _
    $region29: #{tpu_custom_call.1} parent=1 // pred_fallthru
      _
    // Predicated region
    $region30: #{tpu_custom_call.1} parent=1 // pred_check
      _
    $region31: #{tpu_custom_call.1} parent=1 // pred_check_branch
      %31 = sbr.rel (0) target = $region33
    $region32: #{tpu_custom_call.1} parent=1 // pred_region
      %s33 = ssub.s32 1024, 1024
      %34 = vsyncadd [#allocation3], %s33
      %s35 = sshll.u32 [#allocation2], 4
      %s36 = int_to_ptr.vmem [resolvable:$true] %s35
      %41 = dma.hbm_to_vmem [thread:$0]  %s7, 1024, %s36, [#allocation3], 64, 64, 4
    $region33: #{tpu_custom_call.1} parent=1 // pred_fallthru
      _
    // Predicated region
    $region34: #{tpu_custom_call.1} parent=1 // pred_check
      _
    $region35: #{tpu_custom_call.1} parent=1 // pred_check_branch
      %43 = sbr.rel (0) target = $region37
    $region36: #{tpu_custom_call.1} parent=1 // pred_region
      _
    $region37: #{tpu_custom_call.1} parent=1 // pred_fallthru
      _
    // Predicated region
    $region38: #{tpu_custom_call.1} parent=1 // pred_check
      _
    $region39: #{tpu_custom_call.1} parent=1 // pred_check_branch
      %45 = sbr.rel (0) target = $region41
    $region40: #{tpu_custom_call.1} parent=1 // pred_region
      %46 = dma.done [#allocation3], 1024
    $region41: #{tpu_custom_call.1} parent=1 // pred_fallthru
      _
    %v48 = vld [vmem:[%s0] sm:$0xff]
    %v49 = vld [vmem:[%s0 + $0x8] sm:$0xff]
    %v50 = vld [vmem:[%s0 + $0x10] sm:$0xff]
    %v51 = vld [vmem:[%s0 + $0x18] sm:$0xff]
    %v52 = vld [vmem:[%s0 + $0x20] sm:$0xff]
    %v53 = vld [vmem:[%s0 + $0x28] sm:$0xff]
    %v54 = vld [vmem:[%s0 + $0x30] sm:$0xff]
    %v55 = vld [vmem:[%s0 + $0x38] sm:$0xff]
    %v56 = vld [vmem:[%s0 + $0x40] sm:$0xff]
    %v57 = vld [vmem:[%s0 + $0x48] sm:$0xff]
    %v58 = vld [vmem:[%s0 + $0x50] sm:$0xff]
    %v59 = vld [vmem:[%s0 + $0x58] sm:$0xff]
    %v60 = vld [vmem:[%s0 + $0x60] sm:$0xff]
    %v61 = vld [vmem:[%s0 + $0x68] sm:$0xff]
    %v62 = vld [vmem:[%s0 + $0x70] sm:$0xff]
    %v63 = vld [vmem:[%s0 + $0x78] sm:$0xff]
    %v64 = vpack.c.bf16 %v49, %v48
    %v65 = vpack.c.bf16 %v51, %v50
    %v66 = vpack.c.bf16 %v53, %v52
    %v67 = vpack.c.bf16 %v55, %v54
    %v68 = vpack.c.bf16 %v57, %v56
    %v69 = vpack.c.bf16 %v59, %v58
    %v70 = vpack.c.bf16 %v61, %v60
    %v71 = vpack.c.bf16 %v63, %v62
    %v72 = vld [vmem:[%s1] sm:$0xf]
    %v73 = vld [vmem:[%s1 + $0x4] sm:$0xf]
    %v74 = vld [vmem:[%s2] sm:$0x1]
    %v76 = vlaneseq
    %v77 = vshrl.u32 %v76, 7
    %v78 = vsub.s32 0, %v77
    %v79 = vrot.slane %v74, %v78
    %v83 = vunpack.c.l.b16 %v72
    %v84 = vunpack.c.l.b16 %v73
    %v85 = vpack.c.b16 %v84, %v83
    %vm87 = vcmask 130048
    %v89 = vsel %vm87, %v64, 0
    %v92 = vsel %vm87, %v65, 0
    %v95 = vsel %vm87, %v66, 0
    %v98 = vsel %vm87, %v67, 0
    %v101 = vsel %vm87, %v68, 0
    %v104 = vsel %vm87, %v69, 0
    %v107 = vsel %vm87, %v70, 0
    %v110 = vsel %vm87, %v71, 0
    %112 = vmatprep.subr.bf16.mxu0 0
    %113 = vmatpush1.bf16.msra.mxu0 %v85
    %114 = vmatprep.subr.bf16.mxu0 0
    %115 = vmatpush1.bf16.msra.mxu0 0
    %116 = vmatprep.subr.bf16.mxu0 0
    %117 = vmatpush1.bf16.msra.mxu0 0
    %118 = vmatprep.subr.bf16.mxu0 0
    %119 = vmatpush1.bf16.msra.mxu0 0
    %120 = vmatprep.subr.bf16.mxu0 0
    %121 = vmatpush1.bf16.msra.mxu0 0
    %122 = vmatprep.subr.bf16.mxu0 0
    %123 = vmatpush1.bf16.msra.mxu0 0
    %124 = vmatprep.subr.bf16.mxu0 0
    %125 = vmatpush1.bf16.msra.mxu0 0
    %126 = vmatprep.subr.bf16.mxu0 0
    %127 = vmatpush1.bf16.msra.mxu0 0
    %128 = vmatprep.subr.bf16.mxu0 0
    %129 = vmatpush1.bf16.msra.mxu0 0
    %130 = vmatprep.subr.bf16.mxu0 0
    %131 = vmatpush1.bf16.msra.mxu0 0
    %132 = vmatprep.subr.bf16.mxu0 0
    %133 = vmatpush1.bf16.msra.mxu0 0
    %134 = vmatprep.subr.bf16.mxu0 0
    %135 = vmatpush1.bf16.msra.mxu0 0
    %136 = vmatprep.subr.bf16.mxu0 0
    %137 = vmatpush1.bf16.msra.mxu0 0
    %138 = vmatprep.subr.bf16.mxu0 0
    %139 = vmatpush1.bf16.msra.mxu0 0
    %140 = vmatprep.subr.bf16.mxu0 0
    %141 = vmatpush1.bf16.msra.mxu0 0
    %142 = vmatprep.subr.bf16.mxu0 0
    %143 = vmatpush1.bf16.msra.mxu0 0
    %144 = vmatprep.mubr.bf16.mxu0 0
    %145 = vmatmul.mubr.bf16.gmra.mrb[0].mxu0 %v89
    %v146 = vpop.f32.mrb[0].mxu0
    %v147 = vadd.f32 %v79, %v146
    %v148 = vpop.f32.mrb[0].mxu0
    %v149 = vpop.f32.mrb[0].mxu0
    %v150 = vadd.f32 %v79, %v149
    %v151 = vpop.f32.mrb[0].mxu0
    %152 = vmatprep.mubr.bf16.mxu0 0
    %153 = vmatmul.mubr.bf16.gmra.mrb[0].mxu0 %v92
    %v154 = vpop.f32.mrb[0].mxu0
    %v155 = vadd.f32 %v79, %v154
    %v156 = vpop.f32.mrb[0].mxu0
    %v157 = vpop.f32.mrb[0].mxu0
    %v158 = vadd.f32 %v79, %v157
    %v159 = vpop.f32.mrb[0].mxu0
    %160 = vmatprep.mubr.bf16.mxu0 0
    %161 = vmatmul.mubr.bf16.gmra.mrb[0].mxu0 %v95
    %v162 = vpop.f32.mrb[0].mxu0
    %v163 = vadd.f32 %v79, %v162
    %v164 = vpop.f32.mrb[0].mxu0
    %v165 = vpop.f32.mrb[0].mxu0
    %v166 = vadd.f32 %v79, %v165
    %v167 = vpop.f32.mrb[0].mxu0
    %168 = vmatprep.mubr.bf16.mxu0 0
    %169 = vmatmul.mubr.bf16.gmra.mrb[0].mxu0 %v98
    %v170 = vpop.f32.mrb[0].mxu0
    %v171 = vadd.f32 %v79, %v170
    %v172 = vpop.f32.mrb[0].mxu0
    %v173 = vpop.f32.mrb[0].mxu0
    %v174 = vadd.f32 %v79, %v173
    %v175 = vpop.f32.mrb[0].mxu0
    %176 = vmatprep.mubr.bf16.mxu0 0
    %177 = vmatmul.mubr.bf16.gmra.mrb[0].mxu0 %v101
    %v178 = vpop.f32.mrb[0].mxu0
    %v179 = vadd.f32 %v79, %v178
    %v180 = vpop.f32.mrb[0].mxu0
    %v181 = vpop.f32.mrb[0].mxu0
    %v182 = vadd.f32 %v79, %v181
    %v183 = vpop.f32.mrb[0].mxu0
    %184 = vmatprep.mubr.bf16.mxu0 0
    %185 = vmatmul.mubr.bf16.gmra.mrb[0].mxu0 %v104
    %v186 = vpop.f32.mrb[0].mxu0
    %v187 = vadd.f32 %v79, %v186
    %v188 = vpop.f32.mrb[0].mxu0
    %v189 = vpop.f32.mrb[0].mxu0
    %v190 = vadd.f32 %v79, %v189
    %v191 = vpop.f32.mrb[0].mxu0
    %192 = vmatprep.mubr.bf16.mxu0 0
    %193 = vmatmul.mubr.bf16.gmra.mrb[0].mxu0 %v107
    %v194 = vpop.f32.mrb[0].mxu0
    %v195 = vadd.f32 %v79, %v194
    %v196 = vpop.f32.mrb[0].mxu0
    %v197 = vpop.f32.mrb[0].mxu0
    %v198 = vadd.f32 %v79, %v197
    %v199 = vpop.f32.mrb[0].mxu0
    %200 = vmatprep.mubr.bf16.mxu0 0
    %201 = vmatmul.mubr.bf16.gmra.mrb[0].mxu0 %v110
    %v202 = vpop.f32.mrb[0].mxu0
    %v203 = vadd.f32 %v79, %v202
    %v204 = vpop.f32.mrb[0].mxu0
    %v205 = vpop.f32.mrb[0].mxu0
    %v206 = vadd.f32 %v79, %v205
    %v207 = vpop.f32.mrb[0].mxu0
    %208 = vdwg.mxu0
    %v209 = vmax.f32 %v147, 0.0
    %v210 = vmax.f32 %v150, 0.0
    %v211 = vmax.f32 %v155, 0.0
    %v212 = vmax.f32 %v158, 0.0
    %v213 = vmax.f32 %v163, 0.0
    %v214 = vmax.f32 %v166, 0.0
    %v215 = vmax.f32 %v171, 0.0
    %v216 = vmax.f32 %v174, 0.0
    %v217 = vmax.f32 %v179, 0.0
    %v218 = vmax.f32 %v182, 0.0
    %v219 = vmax.f32 %v187, 0.0
    %v220 = vmax.f32 %v190, 0.0
    %v221 = vmax.f32 %v195, 0.0
    %v222 = vmax.f32 %v198, 0.0
    %v223 = vmax.f32 %v203, 0.0
    %v224 = vmax.f32 %v206, 0.0
    %v225 = vpack.c.bf16 %v210, %v209
    %v226 = vpack.c.bf16 %v212, %v211
    %v227 = vpack.c.bf16 %v214, %v213
    %v228 = vpack.c.bf16 %v216, %v215
    %v229 = vpack.c.bf16 %v218, %v217
    %v230 = vpack.c.bf16 %v220, %v219
    %v231 = vpack.c.bf16 %v222, %v221
    %v232 = vpack.c.bf16 %v224, %v223
    %v233 = vld [vmem:[%s3] sm:$0xf]
    %v234 = vld [vmem:[%s3 + $0x4] sm:$0xf]
    %v235 = vld [vmem:[%s3 + $0x8] sm:$0xf]
    %v236 = vld [vmem:[%s3 + $0xc] sm:$0xf]
    %v237 = vld [vmem:[%s3 + $0x10] sm:$0xf]
    %v238 = vld [vmem:[%s3 + $0x14] sm:$0xf]
    %v239 = vld [vmem:[%s3 + $0x18] sm:$0xf]
    %v240 = vld [vmem:[%s3 + $0x1c] sm:$0xf]
    %v241 = vld [vmem:[%s3 + $0x20] sm:$0xf]
    %v242 = vld [vmem:[%s3 + $0x24] sm:$0xf]
    %v243 = vld [vmem:[%s3 + $0x28] sm:$0xf]
    %v244 = vld [vmem:[%s3 + $0x2c] sm:$0xf]
    %v245 = vld [vmem:[%s3 + $0x30] sm:$0xf]
    %v246 = vld [vmem:[%s3 + $0x34] sm:$0xf]
    %v247 = vld [vmem:[%s3 + $0x38] sm:$0xf]
    %v248 = vld [vmem:[%s3 + $0x3c] sm:$0xf]
    %v249 = vld [vmem:[%s4] sm:$0x1]
    %v251 = vlaneseq
    %v252 = vshrl.u32 %v251, 7
    %v253 = vsub.s32 0, %v252
    %v254 = vrot.slane %v249, %v253
    %v272 = vunpack.c.l.b16 %v233
    %v273 = vunpack.c.l.b16 %v234
    %v274 = vunpack.c.l.b16 %v235
    %v275 = vunpack.c.l.b16 %v236
    %v276 = vunpack.c.l.b16 %v237
    %v277 = vunpack.c.l.b16 %v238
    %v278 = vunpack.c.l.b16 %v239
    %v279 = vunpack.c.l.b16 %v240
    %v280 = vunpack.c.l.b16 %v241
    %v281 = vunpack.c.l.b16 %v242
    %v282 = vunpack.c.l.b16 %v243
    %v283 = vunpack.c.l.b16 %v244
    %v284 = vunpack.c.l.b16 %v245
    %v285 = vunpack.c.l.b16 %v246
    %v286 = vunpack.c.l.b16 %v247
    %v287 = vunpack.c.l.b16 %v248
    %v288 = vpack.c.b16 %v273, %v272
    %v289 = vpack.c.b16 %v275, %v274
    %v290 = vpack.c.b16 %v277, %v276
    %v291 = vpack.c.b16 %v279, %v278
    %v292 = vpack.c.b16 %v281, %v280
    %v293 = vpack.c.b16 %v283, %v282
    %v294 = vpack.c.b16 %v285, %v284
    %v295 = vpack.c.b16 %v287, %v286
    %304 = vmatprep.subr.bf16.mxu0 0
    %305 = vmatpush1.bf16.msra.mxu0 %v288
    %306 = vmatprep.subr.bf16.mxu0 0
    %307 = vmatpush1.bf16.msra.mxu0 %v289
    %308 = vmatprep.subr.bf16.mxu0 0
    %309 = vmatpush1.bf16.msra.mxu0 %v290
    %310 = vmatprep.subr.bf16.mxu0 0
    %311 = vmatpush1.bf16.msra.mxu0 %v291
    %312 = vmatprep.subr.bf16.mxu0 0
    %313 = vmatpush1.bf16.msra.mxu0 %v292
    %314 = vmatprep.subr.bf16.mxu0 0
    %315 = vmatpush1.bf16.msra.mxu0 %v293
    %316 = vmatprep.subr.bf16.mxu0 0
    %317 = vmatpush1.bf16.msra.mxu0 %v294
    %318 = vmatprep.subr.bf16.mxu0 0
    %319 = vmatpush1.bf16.msra.mxu0 %v295
    %320 = vmatprep.subr.bf16.mxu0 0
    %321 = vmatpush1.bf16.msra.mxu0 0
    %322 = vmatprep.subr.bf16.mxu0 0
    %323 = vmatpush1.bf16.msra.mxu0 0
    %324 = vmatprep.subr.bf16.mxu0 0
    %325 = vmatpush1.bf16.msra.mxu0 0
    %326 = vmatprep.subr.bf16.mxu0 0
    %327 = vmatpush1.bf16.msra.mxu0 0
    %328 = vmatprep.subr.bf16.mxu0 0
    %329 = vmatpush1.bf16.msra.mxu0 0
    %330 = vmatprep.subr.bf16.mxu0 0
    %331 = vmatpush1.bf16.msra.mxu0 0
    %332 = vmatprep.subr.bf16.mxu0 0
    %333 = vmatpush1.bf16.msra.mxu0 0
    %334 = vmatprep.subr.bf16.mxu0 0
    %335 = vmatpush1.bf16.msra.mxu0 0
    %336 = vmatprep.mubr.bf16.mxu0 0
    %337 = vmatmul.mubr.bf16.gmra.mrb[0].mxu0 %v225
    %v338 = vpop.f32.mrb[0].mxu0
    %v339 = vadd.f32 %v254, %v338
    %v340 = vpop.f32.mrb[0].mxu0
    %v341 = vpop.f32.mrb[0].mxu0
    %v342 = vadd.f32 %v254, %v341
    %v343 = vpop.f32.mrb[0].mxu0
    %344 = vmatprep.mubr.bf16.mxu0 0
    %345 = vmatmul.mubr.bf16.gmra.mrb[0].mxu0 %v226
    %v346 = vpop.f32.mrb[0].mxu0
    %v347 = vadd.f32 %v254, %v346
    %v348 = vpop.f32.mrb[0].mxu0
    %v349 = vpop.f32.mrb[0].mxu0
    %v350 = vadd.f32 %v254, %v349
    %v351 = vpop.f32.mrb[0].mxu0
    %352 = vmatprep.mubr.bf16.mxu0 0
    %353 = vmatmul.mubr.bf16.gmra.mrb[0].mxu0 %v227
    %v354 = vpop.f32.mrb[0].mxu0
    %v355 = vadd.f32 %v254, %v354
    %v356 = vpop.f32.mrb[0].mxu0
    %v357 = vpop.f32.mrb[0].mxu0
    %v358 = vadd.f32 %v254, %v357
    %v359 = vpop.f32.mrb[0].mxu0
    %360 = vmatprep.mubr.bf16.mxu0 0
    %361 = vmatmul.mubr.bf16.gmra.mrb[0].mxu0 %v228
    %v362 = vpop.f32.mrb[0].mxu0
    %v363 = vadd.f32 %v254, %v362
    %v364 = vpop.f32.mrb[0].mxu0
    %v365 = vpop.f32.mrb[0].mxu0
    %v366 = vadd.f32 %v254, %v365
    %v367 = vpop.f32.mrb[0].mxu0
    %368 = vmatprep.mubr.bf16.mxu0 0
    %369 = vmatmul.mubr.bf16.gmra.mrb[0].mxu0 %v229
    %v370 = vpop.f32.mrb[0].mxu0
    %v371 = vadd.f32 %v254, %v370
    %v372 = vpop.f32.mrb[0].mxu0
    %v373 = vpop.f32.mrb[0].mxu0
    %v374 = vadd.f32 %v254, %v373
    %v375 = vpop.f32.mrb[0].mxu0
    %376 = vmatprep.mubr.bf16.mxu0 0
    %377 = vmatmul.mubr.bf16.gmra.mrb[0].mxu0 %v230
    %v378 = vpop.f32.mrb[0].mxu0
    %v379 = vadd.f32 %v254, %v378
    %v380 = vpop.f32.mrb[0].mxu0
    %v381 = vpop.f32.mrb[0].mxu0
    %v382 = vadd.f32 %v254, %v381
    %v383 = vpop.f32.mrb[0].mxu0
    %384 = vmatprep.mubr.bf16.mxu0 0
    %385 = vmatmul.mubr.bf16.gmra.mrb[0].mxu0 %v231
    %v386 = vpop.f32.mrb[0].mxu0
    %v387 = vadd.f32 %v254, %v386
    %v388 = vpop.f32.mrb[0].mxu0
    %v389 = vpop.f32.mrb[0].mxu0
    %v390 = vadd.f32 %v254, %v389
    %v391 = vpop.f32.mrb[0].mxu0
    %392 = vmatprep.mubr.bf16.mxu0 0
    %393 = vmatmul.mubr.bf16.gmra.mrb[0].mxu0 %v232
    %v394 = vpop.f32.mrb[0].mxu0
    %v395 = vadd.f32 %v254, %v394
    %v396 = vpop.f32.mrb[0].mxu0
    %v397 = vpop.f32.mrb[0].mxu0
    %v398 = vadd.f32 %v254, %v397
    %v399 = vpop.f32.mrb[0].mxu0
    %400 = vdwg.mxu0
    %v401 = vmax.f32 %v339, 0.0
    %v402 = vmax.f32 %v342, 0.0
    %v403 = vmax.f32 %v347, 0.0
    %v404 = vmax.f32 %v350, 0.0
    %v405 = vmax.f32 %v355, 0.0
    %v406 = vmax.f32 %v358, 0.0
    %v407 = vmax.f32 %v363, 0.0
    %v408 = vmax.f32 %v366, 0.0
    %v409 = vmax.f32 %v371, 0.0
    %v410 = vmax.f32 %v374, 0.0
    %v411 = vmax.f32 %v379, 0.0
    %v412 = vmax.f32 %v382, 0.0
    %v413 = vmax.f32 %v387, 0.0
    %v414 = vmax.f32 %v390, 0.0
    %v415 = vmax.f32 %v395, 0.0
    %v416 = vmax.f32 %v398, 0.0
    %v417 = vpack.c.bf16 %v402, %v401
    %v418 = vpack.c.bf16 %v404, %v403
    %v419 = vpack.c.bf16 %v406, %v405
    %v420 = vpack.c.bf16 %v408, %v407
    %v421 = vpack.c.bf16 %v410, %v409
    %v422 = vpack.c.bf16 %v412, %v411
    %v423 = vpack.c.bf16 %v414, %v413
    %v424 = vpack.c.bf16 %v416, %v415
    %v425 = vld [vmem:[%s5] sm:$0xf]
    %v426 = vld [vmem:[%s5 + $0x4] sm:$0xf]
    %v427 = vld [vmem:[%s5 + $0x8] sm:$0xf]
    %v428 = vld [vmem:[%s5 + $0xc] sm:$0xf]
    %v429 = vld [vmem:[%s5 + $0x10] sm:$0xf]
    %v430 = vld [vmem:[%s5 + $0x14] sm:$0xf]
    %v431 = vld [vmem:[%s5 + $0x18] sm:$0xf]
    %v432 = vld [vmem:[%s5 + $0x1c] sm:$0xf]
    %v433 = vld [vmem:[%s5 + $0x20] sm:$0xf]
    %v434 = vld [vmem:[%s5 + $0x24] sm:$0xf]
    %v435 = vld [vmem:[%s5 + $0x28] sm:$0xf]
    %v436 = vld [vmem:[%s5 + $0x2c] sm:$0xf]
    %v437 = vld [vmem:[%s5 + $0x30] sm:$0xf]
    %v438 = vld [vmem:[%s5 + $0x34] sm:$0xf]
    %v439 = vld [vmem:[%s5 + $0x38] sm:$0xf]
    %v440 = vld [vmem:[%s5 + $0x3c] sm:$0xf]
    %v441 = vld [vmem:[%s6] sm:$0x1]
    %v443 = vlaneseq
    %v444 = vshrl.u32 %v443, 7
    %v445 = vsub.s32 0, %v444
    %v446 = vrot.slane %v441, %v445
    %v464 = vunpack.c.l.b16 %v425
    %v465 = vunpack.c.l.b16 %v426
    %v466 = vunpack.c.l.b16 %v427
    %v467 = vunpack.c.l.b16 %v428
    %v468 = vunpack.c.l.b16 %v429
    %v469 = vunpack.c.l.b16 %v430
    %v470 = vunpack.c.l.b16 %v431
    %v471 = vunpack.c.l.b16 %v432
    %v472 = vunpack.c.l.b16 %v433
    %v473 = vunpack.c.l.b16 %v434
    %v474 = vunpack.c.l.b16 %v435
    %v475 = vunpack.c.l.b16 %v436
    %v476 = vunpack.c.l.b16 %v437
    %v477 = vunpack.c.l.b16 %v438
    %v478 = vunpack.c.l.b16 %v439
    %v479 = vunpack.c.l.b16 %v440
    %v480 = vpack.c.b16 %v465, %v464
    %v481 = vpack.c.b16 %v467, %v466
    %v482 = vpack.c.b16 %v469, %v468
    %v483 = vpack.c.b16 %v471, %v470
    %v484 = vpack.c.b16 %v473, %v472
    %v485 = vpack.c.b16 %v475, %v474
    %v486 = vpack.c.b16 %v477, %v476
    %v487 = vpack.c.b16 %v479, %v478
    %496 = vmatprep.subr.bf16.mxu0 0
    %497 = vmatpush1.bf16.msra.mxu0 %v480
    %498 = vmatprep.subr.bf16.mxu0 0
    %499 = vmatpush1.bf16.msra.mxu0 %v481
    %500 = vmatprep.subr.bf16.mxu0 0
    %501 = vmatpush1.bf16.msra.mxu0 %v482
    %502 = vmatprep.subr.bf16.mxu0 0
    %503 = vmatpush1.bf16.msra.mxu0 %v483
    %504 = vmatprep.subr.bf16.mxu0 0
    %505 = vmatpush1.bf16.msra.mxu0 %v484
    %506 = vmatprep.subr.bf16.mxu0 0
    %507 = vmatpush1.bf16.msra.mxu0 %v485
    %508 = vmatprep.subr.bf16.mxu0 0
    %509 = vmatpush1.bf16.msra.mxu0 %v486
    %510 = vmatprep.subr.bf16.mxu0 0
    %511 = vmatpush1.bf16.msra.mxu0 %v487
    %512 = vmatprep.subr.bf16.mxu0 0
    %513 = vmatpush1.bf16.msra.mxu0 0
    %514 = vmatprep.subr.bf16.mxu0 0
    %515 = vmatpush1.bf16.msra.mxu0 0
    %516 = vmatprep.subr.bf16.mxu0 0
    %517 = vmatpush1.bf16.msra.mxu0 0
    %518 = vmatprep.subr.bf16.mxu0 0
    %519 = vmatpush1.bf16.msra.mxu0 0
    %520 = vmatprep.subr.bf16.mxu0 0
    %521 = vmatpush1.bf16.msra.mxu0 0
    %522 = vmatprep.subr.bf16.mxu0 0
    %523 = vmatpush1.bf16.msra.mxu0 0
    %524 = vmatprep.subr.bf16.mxu0 0
    %525 = vmatpush1.bf16.msra.mxu0 0
    %526 = vmatprep.subr.bf16.mxu0 0
    %527 = vmatpush1.bf16.msra.mxu0 0
    %528 = vmatprep.mubr.bf16.mxu0 0
    %529 = vmatmul.mubr.bf16.gmra.mrb[0].mxu0 %v417
    %v530 = vpop.f32.mrb[0].mxu0
    %v531 = vadd.f32 %v446, %v530
    %v532 = vpop.f32.mrb[0].mxu0
    %v533 = vpop.f32.mrb[0].mxu0
    %v534 = vadd.f32 %v446, %v533
    %v535 = vpop.f32.mrb[0].mxu0
    %536 = vmatprep.mubr.bf16.mxu0 0
    %537 = vmatmul.mubr.bf16.gmra.mrb[0].mxu0 %v418
    %v538 = vpop.f32.mrb[0].mxu0
    %v539 = vadd.f32 %v446, %v538
    %v540 = vpop.f32.mrb[0].mxu0
    %v541 = vpop.f32.mrb[0].mxu0
    %v542 = vadd.f32 %v446, %v541
    %v543 = vpop.f32.mrb[0].mxu0
    %544 = vmatprep.mubr.bf16.mxu0 0
    %545 = vmatmul.mubr.bf16.gmra.mrb[0].mxu0 %v419
    %v546 = vpop.f32.mrb[0].mxu0
    %v547 = vadd.f32 %v446, %v546
    %v548 = vpop.f32.mrb[0].mxu0
    %v549 = vpop.f32.mrb[0].mxu0
    %v550 = vadd.f32 %v446, %v549
    %v551 = vpop.f32.mrb[0].mxu0
    %552 = vmatprep.mubr.bf16.mxu0 0
    %553 = vmatmul.mubr.bf16.gmra.mrb[0].mxu0 %v420
    %v554 = vpop.f32.mrb[0].mxu0
    %v555 = vadd.f32 %v446, %v554
    %v556 = vpop.f32.mrb[0].mxu0
    %v557 = vpop.f32.mrb[0].mxu0
    %v558 = vadd.f32 %v446, %v557
    %v559 = vpop.f32.mrb[0].mxu0
    %560 = vmatprep.mubr.bf16.mxu0 0
    %561 = vmatmul.mubr.bf16.gmra.mrb[0].mxu0 %v421
    %v562 = vpop.f32.mrb[0].mxu0
    %v563 = vadd.f32 %v446, %v562
    %v564 = vpop.f32.mrb[0].mxu0
    %v565 = vpop.f32.mrb[0].mxu0
    %v566 = vadd.f32 %v446, %v565
    %v567 = vpop.f32.mrb[0].mxu0
    %568 = vmatprep.mubr.bf16.mxu0 0
    %569 = vmatmul.mubr.bf16.gmra.mrb[0].mxu0 %v422
    %v570 = vpop.f32.mrb[0].mxu0
    %v571 = vadd.f32 %v446, %v570
    %v572 = vpop.f32.mrb[0].mxu0
    %v573 = vpop.f32.mrb[0].mxu0
    %v574 = vadd.f32 %v446, %v573
    %v575 = vpop.f32.mrb[0].mxu0
    %576 = vmatprep.mubr.bf16.mxu0 0
    %577 = vmatmul.mubr.bf16.gmra.mrb[0].mxu0 %v423
    %v578 = vpop.f32.mrb[0].mxu0
    %v579 = vadd.f32 %v446, %v578
    %v580 = vpop.f32.mrb[0].mxu0
    %v581 = vpop.f32.mrb[0].mxu0
    %v582 = vadd.f32 %v446, %v581
    %v583 = vpop.f32.mrb[0].mxu0
    %584 = vmatprep.mubr.bf16.mxu0 0
    %585 = vmatmul.mubr.bf16.gmra.mrb[0].mxu0 %v424
    %v586 = vpop.f32.mrb[0].mxu0
    %v587 = vadd.f32 %v446, %v586
    %v588 = vpop.f32.mrb[0].mxu0
    %v589 = vpop.f32.mrb[0].mxu0
    %v590 = vadd.f32 %v446, %v589
    %v591 = vpop.f32.mrb[0].mxu0
    %592 = vdwg.mxu0
    %v593 = vmax.f32 %v531, 0.0
    %v594 = vmax.f32 %v534, 0.0
    %v595 = vmax.f32 %v539, 0.0
    %v596 = vmax.f32 %v542, 0.0
    %v597 = vmax.f32 %v547, 0.0
    %v598 = vmax.f32 %v550, 0.0
    %v599 = vmax.f32 %v555, 0.0
    %v600 = vmax.f32 %v558, 0.0
    %v601 = vmax.f32 %v563, 0.0
    %v602 = vmax.f32 %v566, 0.0
    %v603 = vmax.f32 %v571, 0.0
    %v604 = vmax.f32 %v574, 0.0
    %v605 = vmax.f32 %v579, 0.0
    %v606 = vmax.f32 %v582, 0.0
    %v607 = vmax.f32 %v587, 0.0
    %v608 = vmax.f32 %v590, 0.0
    %v609 = vpack.c.bf16 %v594, %v593
    %v610 = vpack.c.bf16 %v596, %v595
    %v611 = vpack.c.bf16 %v598, %v597
    %v612 = vpack.c.bf16 %v600, %v599
    %v613 = vpack.c.bf16 %v602, %v601
    %v614 = vpack.c.bf16 %v604, %v603
    %v615 = vpack.c.bf16 %v606, %v605
    %v616 = vpack.c.bf16 %v608, %v607
    %v617 = vld [vmem:[#allocation2] sm:$0xf]
    %v618 = vld [vmem:[#allocation2 + $0x4] sm:$0xf]
    %v619 = vld [vmem:[#allocation2 + $0x8] sm:$0xf]
    %v620 = vld [vmem:[#allocation2 + $0xc] sm:$0xf]
    %v621 = vld [vmem:[#allocation2 + $0x10] sm:$0xf]
    %v622 = vld [vmem:[#allocation2 + $0x14] sm:$0xf]
    %v623 = vld [vmem:[#allocation2 + $0x18] sm:$0xf]
    %v624 = vld [vmem:[#allocation2 + $0x1c] sm:$0xf]
    %v625 = vld [vmem:[#allocation2 + $0x20] sm:$0xf]
    %v626 = vld [vmem:[#allocation2 + $0x24] sm:$0xf]
    %v627 = vld [vmem:[#allocation2 + $0x28] sm:$0xf]
    %v628 = vld [vmem:[#allocation2 + $0x2c] sm:$0xf]
    %v629 = vld [vmem:[#allocation2 + $0x30] sm:$0xf]
    %v630 = vld [vmem:[#allocation2 + $0x34] sm:$0xf]
    %v631 = vld [vmem:[#allocation2 + $0x38] sm:$0xf]
    %v632 = vld [vmem:[#allocation2 + $0x3c] sm:$0xf]
    %v633 = vld [vmem:[%s8] sm:$0x1]
    %v635 = vlaneseq
    %v636 = vshrl.u32 %v635, 7
    %v637 = vsub.s32 0, %v636
    %v638 = vrot.slane %v633, %v637
    %v656 = vunpack.c.l.b16 %v617
    %v657 = vunpack.c.l.b16 %v618
    %v658 = vunpack.c.l.b16 %v619
    %v659 = vunpack.c.l.b16 %v620
    %v660 = vunpack.c.l.b16 %v621
    %v661 = vunpack.c.l.b16 %v622
    %v662 = vunpack.c.l.b16 %v623
    %v663 = vunpack.c.l.b16 %v624
    %v664 = vunpack.c.l.b16 %v625
    %v665 = vunpack.c.l.b16 %v626
    %v666 = vunpack.c.l.b16 %v627
    %v667 = vunpack.c.l.b16 %v628
    %v668 = vunpack.c.l.b16 %v629
    %v669 = vunpack.c.l.b16 %v630
    %v670 = vunpack.c.l.b16 %v631
    %v671 = vunpack.c.l.b16 %v632
    %v672 = vpack.c.b16 %v657, %v656
    %v673 = vpack.c.b16 %v659, %v658
    %v674 = vpack.c.b16 %v661, %v660
    %v675 = vpack.c.b16 %v663, %v662
    %v676 = vpack.c.b16 %v665, %v664
    %v677 = vpack.c.b16 %v667, %v666
    %v678 = vpack.c.b16 %v669, %v668
    %v679 = vpack.c.b16 %v671, %v670
    %688 = vmatprep.subr.bf16.mxu0 0
    %689 = vmatpush1.bf16.msra.mxu0 %v672
    %690 = vmatprep.subr.bf16.mxu0 0
    %691 = vmatpush1.bf16.msra.mxu0 %v673
    %692 = vmatprep.subr.bf16.mxu0 0
    %693 = vmatpush1.bf16.msra.mxu0 %v674
    %694 = vmatprep.subr.bf16.mxu0 0
    %695 = vmatpush1.bf16.msra.mxu0 %v675
    %696 = vmatprep.subr.bf16.mxu0 0
    %697 = vmatpush1.bf16.msra.mxu0 %v676
    %698 = vmatprep.subr.bf16.mxu0 0
    %699 = vmatpush1.bf16.msra.mxu0 %v677
    %700 = vmatprep.subr.bf16.mxu0 0
    %701 = vmatpush1.bf16.msra.mxu0 %v678
    %702 = vmatprep.subr.bf16.mxu0 0
    %703 = vmatpush1.bf16.msra.mxu0 %v679
    %704 = vmatprep.subr.bf16.mxu0 0
    %705 = vmatpush1.bf16.msra.mxu0 0
    %706 = vmatprep.subr.bf16.mxu0 0
    %707 = vmatpush1.bf16.msra.mxu0 0
    %708 = vmatprep.subr.bf16.mxu0 0
    %709 = vmatpush1.bf16.msra.mxu0 0
    %710 = vmatprep.subr.bf16.mxu0 0
    %711 = vmatpush1.bf16.msra.mxu0 0
    %712 = vmatprep.subr.bf16.mxu0 0
    %713 = vmatpush1.bf16.msra.mxu0 0
    %714 = vmatprep.subr.bf16.mxu0 0
    %715 = vmatpush1.bf16.msra.mxu0 0
    %716 = vmatprep.subr.bf16.mxu0 0
    %717 = vmatpush1.bf16.msra.mxu0 0
    %718 = vmatprep.subr.bf16.mxu0 0
    %719 = vmatpush1.bf16.msra.mxu0 0
    %720 = vmatprep.mubr.bf16.mxu0 0
    %721 = vmatmul.mubr.bf16.gmra.mrb[0].mxu0 %v609
    %v722 = vpop.f32.mrb[0].mxu0
    %v723 = vadd.f32 %v638, %v722
    %v724 = vpop.f32.mrb[0].mxu0
    %v725 = vpop.f32.mrb[0].mxu0
    %v726 = vadd.f32 %v638, %v725
    %v727 = vpop.f32.mrb[0].mxu0
    %728 = vmatprep.mubr.bf16.mxu0 0
    %729 = vmatmul.mubr.bf16.gmra.mrb[0].mxu0 %v610
    %v730 = vpop.f32.mrb[0].mxu0
    %v731 = vadd.f32 %v638, %v730
    %v732 = vpop.f32.mrb[0].mxu0
    %v733 = vpop.f32.mrb[0].mxu0
    %v734 = vadd.f32 %v638, %v733
    %v735 = vpop.f32.mrb[0].mxu0
    %736 = vmatprep.mubr.bf16.mxu0 0
    %737 = vmatmul.mubr.bf16.gmra.mrb[0].mxu0 %v611
    %v738 = vpop.f32.mrb[0].mxu0
    %v739 = vadd.f32 %v638, %v738
    %v740 = vpop.f32.mrb[0].mxu0
    %v741 = vpop.f32.mrb[0].mxu0
    %v742 = vadd.f32 %v638, %v741
    %v743 = vpop.f32.mrb[0].mxu0
    %744 = vmatprep.mubr.bf16.mxu0 0
    %745 = vmatmul.mubr.bf16.gmra.mrb[0].mxu0 %v612
    %v746 = vpop.f32.mrb[0].mxu0
    %v747 = vadd.f32 %v638, %v746
    %v748 = vpop.f32.mrb[0].mxu0
    %v749 = vpop.f32.mrb[0].mxu0
    %v750 = vadd.f32 %v638, %v749
    %v751 = vpop.f32.mrb[0].mxu0
    %752 = vmatprep.mubr.bf16.mxu0 0
    %753 = vmatmul.mubr.bf16.gmra.mrb[0].mxu0 %v613
    %v754 = vpop.f32.mrb[0].mxu0
    %v755 = vadd.f32 %v638, %v754
    %v756 = vpop.f32.mrb[0].mxu0
    %v757 = vpop.f32.mrb[0].mxu0
    %v758 = vadd.f32 %v638, %v757
    %v759 = vpop.f32.mrb[0].mxu0
    %760 = vmatprep.mubr.bf16.mxu0 0
    %761 = vmatmul.mubr.bf16.gmra.mrb[0].mxu0 %v614
    %v762 = vpop.f32.mrb[0].mxu0
    %v763 = vadd.f32 %v638, %v762
    %v764 = vpop.f32.mrb[0].mxu0
    %v765 = vpop.f32.mrb[0].mxu0
    %v766 = vadd.f32 %v638, %v765
    %v767 = vpop.f32.mrb[0].mxu0
    %768 = vmatprep.mubr.bf16.mxu0 0
    %769 = vmatmul.mubr.bf16.gmra.mrb[0].mxu0 %v615
    %v770 = vpop.f32.mrb[0].mxu0
    %v771 = vadd.f32 %v638, %v770
    %v772 = vpop.f32.mrb[0].mxu0
    %v773 = vpop.f32.mrb[0].mxu0
    %v774 = vadd.f32 %v638, %v773
    %v775 = vpop.f32.mrb[0].mxu0
    %776 = vmatprep.mubr.bf16.mxu0 0
    %777 = vmatmul.mubr.bf16.gmra.mrb[0].mxu0 %v616
    %v778 = vpop.f32.mrb[0].mxu0
    %v779 = vadd.f32 %v638, %v778
    %v780 = vpop.f32.mrb[0].mxu0
    %v781 = vpop.f32.mrb[0].mxu0
    %v782 = vadd.f32 %v638, %v781
    %v783 = vpop.f32.mrb[0].mxu0
    %784 = vdwg.mxu0
    %785 = vst [vmem:[#allocation5] sm:$0xff] %v723
    %786 = vst [vmem:[#allocation5 + $0x8] sm:$0xff] %v726
    %787 = vst [vmem:[#allocation5 + $0x10] sm:$0xff] %v731
    %788 = vst [vmem:[#allocation5 + $0x18] sm:$0xff] %v734
    %789 = vst [vmem:[#allocation5 + $0x20] sm:$0xff] %v739
    %790 = vst [vmem:[#allocation5 + $0x28] sm:$0xff] %v742
    %791 = vst [vmem:[#allocation5 + $0x30] sm:$0xff] %v747
    %792 = vst [vmem:[#allocation5 + $0x38] sm:$0xff] %v750
    %793 = vst [vmem:[#allocation5 + $0x40] sm:$0xff] %v755
    %794 = vst [vmem:[#allocation5 + $0x48] sm:$0xff] %v758
    %795 = vst [vmem:[#allocation5 + $0x50] sm:$0xff] %v763
    %796 = vst [vmem:[#allocation5 + $0x58] sm:$0xff] %v766
    %797 = vst [vmem:[#allocation5 + $0x60] sm:$0xff] %v771
    %798 = vst [vmem:[#allocation5 + $0x68] sm:$0xff] %v774
    %799 = vst [vmem:[#allocation5 + $0x70] sm:$0xff] %v779
    %800 = vst [vmem:[#allocation5 + $0x78] sm:$0xff] %v782
    // Predicated region
    $region42: #{tpu_custom_call.1} parent=1 // pred_check
      _
    $region43: #{tpu_custom_call.1} parent=1 // pred_check_branch
      %802 = sbr.rel (0) target = $region45
    $region44: #{tpu_custom_call.1} parent=1 // pred_region
      %s804 = ssub.s32 2048, 2048
      %805 = vsyncadd [#allocation4], %s804
      %s806 = sshll.u32 [#allocation5], 4
      %s807 = int_to_ptr.vmem [resolvable:$true] %s806
      %812 = dma.vmem_to_hbm [thread:$0]  %s807, 2048, %s9, [#allocation4], 128, 128, 8
    $region45: #{tpu_custom_call.1} parent=1 // pred_fallthru
      _
    // Predicated region
    $region46: #{tpu_custom_call.1} parent=1 // pred_check
      _
    $region47: #{tpu_custom_call.1} parent=1 // pred_check_branch
      %814 = sbr.rel (0) target = $region49
    $region48: #{tpu_custom_call.1} parent=1 // pred_region
      %815 = dma.done [#allocation4], 2048
    $region49: #{tpu_custom_call.1} parent=1 // pred_fallthru
      _
    %816 = vsyncpa [#allocation3], 1
    %817 = vsyncpa [#allocation4], 1

</llo_original>
